<compile_context>
chip_gen: v6e
topology: v6e:2x2x1
jax: 0.10.0
libtpu: 0.0.40
codegen_flags: <defaults>
</compile_context>

<pallas_src>
import functools
import math

import jax
import jax.numpy as jnp
from jax import lax
from jax.experimental import pallas as pl
from jax.experimental.pallas import tpu as pltpu

EPS = 1e-5                  # cfg.bn.eps (PyTorch default)
_MAX_FOLDED_LANES = 8192    # cap on folded lane width k*D


def _round_up(v, m):
    return ((v + m - 1) // m) * m


def _chip_config():
    """Per-generation tiling / VMEM budgets."""
    kind = ""
    try:
        kind = jax.devices()[0].device_kind.lower()
    except Exception:
        pass
    if "v7" in kind or "7x" in kind:
        # 64 MiB VMEM per TC, 2 TCs per chip: split the reduction, keep tiles
        # and the fused threshold modest.
        return dict(nc=2, p1_tile=4 << 20, p2_tile=6 << 20,
                    vmem_limit=52 << 20, fused_max=12 << 20,
                    fused_vmem=56 << 20)
    # v5e / v6e: 128 MiB VMEM, single TensorCore.
    return dict(nc=1, p1_tile=8 << 20, p2_tile=12 << 20,
                vmem_limit=100 << 20, fused_max=24 << 20,
                fused_vmem=112 << 20)


# --------------------------- fused single-kernel path ------------------------

def _fused_kernel(x_ref, gamma_ref, beta_ref, o_ref, *, eps, n_rows):
    x = x_ref[...].astype(jnp.float32)
    inv_n = 1.0 / n_rows
    mean = jnp.sum(x, axis=0, keepdims=True) * inv_n
    xc = x - mean
    var = jnp.sum(xc * xc, axis=0, keepdims=True) * inv_n   # centered -> stable
    invstd = lax.rsqrt(var + eps)
    g = gamma_ref[...].astype(jnp.float32)
    b = beta_ref[...].astype(jnp.float32)
    o_ref[...] = (xc * (invstd * g) + b).astype(o_ref.dtype)


def _fused_path(x, gamma, beta, eps, cfg):
    E, D = x.shape
    return pl.pallas_call(
        functools.partial(_fused_kernel, eps=eps, n_rows=E),
        out_shape=jax.ShapeDtypeStruct((E, D), x.dtype),
        in_specs=[pl.BlockSpec(memory_space=pltpu.MemorySpace.VMEM)] * 3,
        out_specs=pl.BlockSpec(memory_space=pltpu.MemorySpace.VMEM),
        compiler_params=pltpu.CompilerParams(
            vmem_limit_bytes=cfg["fused_vmem"]),
    )(x, gamma.reshape(1, D), beta.reshape(1, D))


# --------------------------- tiled two-pass path -----------------------------

def _stats_kernel(x_ref, cnt_ref, mean_ref, m2_ref, *, steps, br, k, d, n_rows):
    """Streaming per-core Welford/Chan partial stats over row tiles.

    x_ref block: (br, Dl) with Dl = k*d (lane-folded).  Ragged-tail rows
    (original row index >= n_rows) are masked out; clamped fully-OOB blocks
    contribute nothing because their nominal row range is entirely masked.
    """
    c = pl.program_id(0)
    i = pl.program_id(1)

    @pl.when(i == 0)
    def _():
        cnt_ref[...] = jnp.zeros_like(cnt_ref)
        mean_ref[...] = jnp.zeros_like(mean_ref)
        m2_ref[...] = jnp.zeros_like(m2_ref)

    x = x_ref[...].astype(jnp.float32)            # DMA in native dtype, cast in-reg
    base = (c * steps + i) * br                   # nominal folded-row offset of tile
    frow = lax.broadcasted_iota(jnp.int32, x.shape, 0) + base
    sub = lax.broadcasted_iota(jnp.int32, x.shape, 1) // d
    valid = (frow * k + sub) < n_rows             # original edge index < num_edges
    validf = valid.astype(jnp.float32)

    # Per-tile centered statistics (per lane column).
    cnt_t = jnp.sum(validf, axis=0, keepdims=True)                       # (1, Dl)
    sum_t = jnp.sum(jnp.where(valid, x, 0.0), axis=0, keepdims=True)
    mean_t = sum_t / jnp.maximum(cnt_t, 1.0)
    dev = jnp.where(valid, x - mean_t, 0.0)
    m2_t = jnp.sum(dev * dev, axis=0, keepdims=True)

    # Chan merge into the running (count, mean, M2) accumulators.
    n_a = cnt_ref[...]
    mean_a = mean_ref[...]
    m2_a = m2_ref[...]
    cnt_t3 = cnt_t[None]          # (1, 1, Dl) — metadata-only lift
    mean_t3 = mean_t[None]
    m2_t3 = m2_t[None]
    n_tot = n_a + cnt_t3
    w = cnt_t3 / jnp.maximum(n_tot, 1.0)
    delta = mean_t3 - mean_a
    mean_ref[...] = mean_a + delta * w
    m2_ref[...] = m2_a + m2_t3 + delta * delta * (n_a * w)
    cnt_ref[...] = n_tot


def _norm_kernel(x_ref, scale_ref, shift_ref, o_ref):
    """y = x * scale + shift (affine folded into two broadcast vectors)."""
    x = x_ref[...].astype(jnp.float32)
    o_ref[...] = (x * scale_ref[...] + shift_ref[...]).astype(o_ref.dtype)


def _tiled_path(x, gamma, beta, eps, cfg):
    E, D = x.shape
    nc = cfg["nc"]
    pack = max(8, 32 // max(1, x.dtype.itemsize))   # native sublane packing

    # Lane folding: fold k rows into lanes so the last dim is a multiple of
    # 128 (unmasked stores).  Only when it is a zero-copy reshape (E % k == 0);
    # otherwise keep (E, D) unfolded — no padding copies either way.
    k = 1
    if D % 128 != 0:
        k_cand = 128 // math.gcd(D, 128)
        if k_cand * D <= _MAX_FOLDED_LANES and E % k_cand == 0:
            k = k_cand
    Dl = k * D
    rows = E // k if k > 1 else E
    xf = x.reshape(rows, Dl) if k > 1 else x        # metadata-only reshape

    lane_pad = _round_up(Dl, 128)                   # VMEM lane footprint of a block

    def row_tile(target_bytes):
        br = target_bytes // (lane_pad * 4)
        br = min(br, _round_up(pl.cdiv(rows, nc), pack))
        return max(pack, (br // pack) * pack)

    # ---- Pass 1: per-core centered partial stats (reduction axis last). ----
    br1 = row_tile(cfg["p1_tile"])
    steps = pl.cdiv(rows, nc * br1)
    nblk1 = pl.cdiv(rows, br1)

    def x_map1(c, i):
        # Clamp: blocks past the end (possible when nc*steps > nblk1) re-read
        # the last block; their nominal row range is fully masked in-kernel.
        return (jnp.minimum(c * steps + i, nblk1 - 1), 0)

    cnt_p, mean_p, m2_p = pl.pallas_call(
        functools.partial(_stats_kernel, steps=steps, br=br1, k=k, d=D,
                          n_rows=E),
        out_shape=(jax.ShapeDtypeStruct((nc, 1, Dl), jnp.float32),) * 3,
        grid=(nc, steps),
        in_specs=[pl.BlockSpec((br1, Dl), x_map1)],
        out_specs=(pl.BlockSpec((1, 1, Dl), lambda c, i: (c, 0, 0)),) * 3,
        compiler_params=pltpu.CompilerParams(
            dimension_semantics=("parallel", "arbitrary"),
            vmem_limit_bytes=cfg["vmem_limit"]),
    )(xf)

    # ---- Glue: exact multi-group Chan combine (cores x lane folds), tiny. ----
    cnt_g = cnt_p.reshape(nc * k, D)
    mean_g = mean_p.reshape(nc * k, D)
    m2_g = m2_p.reshape(nc * k, D)
    n_tot = jnp.maximum(jnp.sum(cnt_g, axis=0), 1.0)      # == E per feature
    mean = jnp.sum(cnt_g * mean_g, axis=0) / n_tot
    m2 = jnp.sum(m2_g + cnt_g * (mean_g - mean) ** 2, axis=0)
    var = m2 / n_tot                                      # biased var (training BN)
    invstd = lax.rsqrt(var + eps)
    scale = gamma.astype(jnp.float32) * invstd
    shift = beta.astype(jnp.float32) - mean * scale
    scale_f = jnp.tile(scale, (k,)).reshape(1, Dl)
    shift_f = jnp.tile(shift, (k,)).reshape(1, Dl)

    # ---- Pass 2: y = x*scale + shift, large fully-parallel row tiles.    ----
    # Partial last block: OOB input rows are garbage but their outputs are
    # clipped on writeback, so no masking and no pad/slice copies are needed.
    br2 = row_tile(cfg["p2_tile"])
    out_f = pl.pallas_call(
        _norm_kernel,
        out_shape=jax.ShapeDtypeStruct((rows, Dl), x.dtype),
        grid=(pl.cdiv(rows, br2),),
        in_specs=[pl.BlockSpec((br2, Dl), lambda i: (i, 0)),
                  pl.BlockSpec((1, Dl), lambda i: (0, 0)),
                  pl.BlockSpec((1, Dl), lambda i: (0, 0))],
        out_specs=pl.BlockSpec((br2, Dl), lambda i: (i, 0)),
        compiler_params=pltpu.CompilerParams(
            dimension_semantics=("parallel",),
            vmem_limit_bytes=cfg["vmem_limit"]),
    )(xf, scale_f, shift_f)

    return out_f.reshape(E, D) if k > 1 else out_f


# --------------------------------- wrapper -----------------------------------

def batchnorm1d_edge(edge_feature, gamma, beta, *, eps=EPS, force_tiled=False):
    """Forward of BatchNorm1dEdge on batch.edge_feature of shape (E, D)."""
    E, D = edge_feature.shape
    cfg = _chip_config()
    if (not force_tiled) and (E * D * 4 <= cfg["fused_max"]):
        return _fused_path(edge_feature, gamma, beta, eps, cfg)
    return _tiled_path(edge_feature, gamma, beta, eps, cfg)


if __name__ == "__main__":
    key = jax.random.PRNGKey(0)
    k1, k2, k3, k4, k5, k6 = jax.random.split(key, 6)

    def ref_bn(x, g, b, eps=EPS):
        x = x.astype(jnp.float32)
        m = jnp.mean(x, axis=0, keepdims=True)
        v = jnp.mean((x - m) ** 2, axis=0, keepdims=True)
        return (x - m) * lax.rsqrt(v + eps) * g + b

    # 1) Small batch.edge_feature (num_edges=64, dim_in=32): fused fast path.
    x1 = jax.random.normal(k1, (64, 32), dtype=jnp.float32)
    g1 = jnp.ones((32,), jnp.float32)     # nn.BatchNorm1d init: weight=1
    b1 = jnp.zeros((32,), jnp.float32)    # bias=0
    o1 = jax.block_until_ready(batchnorm1d_edge(x1, g1, b1))
    assert jnp.allclose(o1, ref_bn(x1, g1, b1), atol=1e-4, rtol=1e-4), \
        "fused path mismatch"

    # 2) Tiled path, lane-folded (D=32 -> 128 lanes), ragged last tile masked,
    #    no padding/slicing copies.
    x2 = 3.0 + 2.0 * jax.random.normal(k2, (3000, 32), dtype=jnp.float32)
    g2 = 0.5 + jax.random.uniform(k3, (32,), dtype=jnp.float32)
    b2 = jax.random.normal(k4, (32,), dtype=jnp.float32)
    o2 = jax.block_until_ready(batchnorm1d_edge(x2, g2, b2, force_tiled=True))
    assert jnp.allclose(o2, ref_bn(x2, g2, b2), atol=1e-3, rtol=1e-3), \
        "tiled (folded) path mismatch"

    # 3) Ragged, un-foldable edge count (E % k != 0): unfolded narrow-lane
    #    layout, in-kernel tail masking, partial-block output clipping.
    x3 = -2.0 + 0.5 * jax.random.normal(k5, (1003, 48), dtype=jnp.float32)
    g3 = jnp.ones((48,), jnp.float32)
    b3 = jnp.zeros((48,), jnp.float32)
    o3 = jax.block_until_ready(batchnorm1d_edge(x3, g3, b3, force_tiled=True))
    assert jnp.allclose(o3, ref_bn(x3, g3, b3), atol=1e-3, rtol=1e-3), \
        "tiled (ragged, unfolded) path mismatch"

    # 4) bf16 edge features: narrow-dtype DMA, 16-row sublane packing.
    x4 = (1.0 + jax.random.normal(k6, (2000, 64), dtype=jnp.float32)
          ).astype(jnp.bfloat16)
    g4 = jnp.ones((64,), jnp.float32)
    b4 = jnp.zeros((64,), jnp.float32)
    o4 = jax.block_until_ready(batchnorm1d_edge(x4, g4, b4, force_tiled=True))
    assert jnp.allclose(o4.astype(jnp.float32), ref_bn(x4, g4, b4),
                        atol=5e-2, rtol=5e-2), "tiled bf16 path mismatch"

    print("KERNEL_OK")
</pallas_src>

<mosaic_0001>
module attributes {stable_mosaic.version = 11 : i64} {
  func.func @_fused_kernel(%arg0: memref<64x32xf32, #tpu.memory_space<vmem>>, %arg1: memref<1x32xf32, #tpu.memory_space<vmem>>, %arg2: memref<1x32xf32, #tpu.memory_space<vmem>>, %arg3: memref<64x32xf32, #tpu.memory_space<vmem>>) attributes {dimension_semantics = [], scalar_prefetch = 0 : i64, scratch_operands = 0 : i64, tpu.core_type = #tpu.core_type<tc>} {
    %c0 = arith.constant 0 : index
    %c0_0 = arith.constant 0 : index
    %0 = vector.load %arg0[%c0, %c0_0] : memref<64x32xf32, #tpu.memory_space<vmem>>, vector<64x32xf32>
    %cst = arith.constant dense<0.000000e+00> : vector<32xf32>
    %1 = vector.multi_reduction <add>, %0, %cst [0] : vector<64x32xf32> to vector<32xf32>
    %2 = vector.shape_cast %1 : vector<32xf32> to vector<1x32xf32>
    %cst_1 = arith.constant 1.562500e-02 : f32
    %3 = vector.broadcast %cst_1 : f32 to vector<1x32xf32>
    %4 = arith.mulf %2, %3 : vector<1x32xf32>
    %5 = vector.broadcast %4 : vector<1x32xf32> to vector<64x32xf32>
    %6 = arith.subf %0, %5 : vector<64x32xf32>
    %7 = arith.mulf %6, %6 : vector<64x32xf32>
    %cst_2 = arith.constant dense<0.000000e+00> : vector<32xf32>
    %8 = vector.multi_reduction <add>, %7, %cst_2 [0] : vector<64x32xf32> to vector<32xf32>
    %9 = vector.shape_cast %8 : vector<32xf32> to vector<1x32xf32>
    %cst_3 = arith.constant 1.562500e-02 : f32
    %10 = vector.broadcast %cst_3 : f32 to vector<1x32xf32>
    %11 = arith.mulf %9, %10 : vector<1x32xf32>
    %cst_4 = arith.constant 9.99999974E-6 : f32
    %12 = vector.broadcast %cst_4 : f32 to vector<1x32xf32>
    %13 = arith.addf %11, %12 : vector<1x32xf32>
    %14 = math.rsqrt %13 : vector<1x32xf32>
    %c0_5 = arith.constant 0 : index
    %c0_6 = arith.constant 0 : index
    %15 = vector.load %arg1[%c0_5, %c0_6] : memref<1x32xf32, #tpu.memory_space<vmem>>, vector<1x32xf32>
    %c0_7 = arith.constant 0 : index
    %c0_8 = arith.constant 0 : index
    %16 = vector.load %arg2[%c0_7, %c0_8] : memref<1x32xf32, #tpu.memory_space<vmem>>, vector<1x32xf32>
    %17 = arith.mulf %14, %15 : vector<1x32xf32>
    %18 = vector.broadcast %17 : vector<1x32xf32> to vector<64x32xf32>
    %19 = arith.mulf %6, %18 : vector<64x32xf32>
    %20 = vector.broadcast %16 : vector<1x32xf32> to vector<64x32xf32>
    %21 = arith.addf %19, %20 : vector<64x32xf32>
    %c0_9 = arith.constant 0 : index
    %c0_10 = arith.constant 0 : index
    %22 = vector.load %arg3[%c0_9, %c0_10] : memref<64x32xf32, #tpu.memory_space<vmem>>, vector<64x32xf32>
    tpu.vector_store %arg3[%c0_9, %c0_10], %21 {strides = array<i32>} : memref<64x32xf32, #tpu.memory_space<vmem>>, vector<64x32xf32>,
    return
  }
}

</mosaic_0001>

<llo_original>
// kernel: tpu_custom_call.1
$region0: #{tpu_custom_call.1}
  #allocation0 [shape = 'u32[]', space=smem, size = 0x4, offset = 0x4, fixed_abs, tag = 'smem constant byte address 0x4 - core index']
  #allocation1 [shape = 'u32[144,128]{1,0:T(1,128)}', space=vmem, size = 0x12000, scoped, tag = 'internal scratch']
  %s0 = inlined_call_operand.vmem [shape: f32[64,32], index: 0, kind: input, shape index: {}]
  %s1 = inlined_call_operand.vmem [shape: f32[1,32], index: 1, kind: input, shape index: {}]
  %s2 = inlined_call_operand.vmem [shape: f32[1,32], index: 2, kind: input, shape index: {}]
  %s3 = inlined_call_operand.vmem [shape: f32[64,32], index: 3, kind: output, shape index: {}]
  %s4 = sld [smem:[#allocation0]]
  $region22: #{tpu_custom_call.1} parent=0
    _
  %s6 = ssub.s32 1, %s4
  %s7 = scalar_select 0, %s6, %s4
  // Predicated region
  $region2: #{tpu_custom_call.1} parent=0 // pred_check
    _
  $region3: #{tpu_custom_call.1} parent=0 // pred_check_branch
    %9 = sbr.rel (0) target = $region5
  $region4: #{tpu_custom_call.1} parent=0 // pred_region
    _
  $region5: #{tpu_custom_call.1} parent=0 // pred_fallthru
    _
  // Predicated region
  $region6: #{tpu_custom_call.1} parent=0 // pred_check
    _
  $region7: #{tpu_custom_call.1} parent=0 // pred_check_branch
    %11 = sbr.rel (0) target = $region9
  $region8: #{tpu_custom_call.1} parent=0 // pred_region
    _
  $region9: #{tpu_custom_call.1} parent=0 // pred_fallthru
    _
  // Predicated region
  $region10: #{tpu_custom_call.1} parent=0 // pred_check
    _
  $region11: #{tpu_custom_call.1} parent=0 // pred_check_branch
    %13 = sbr.rel (0) target = $region13
  $region12: #{tpu_custom_call.1} parent=0 // pred_region
    _
  $region13: #{tpu_custom_call.1} parent=0 // pred_fallthru
    _
  %v14 = vld [vmem:[%s0] sm:$0xff]
  %v15 = vld [vmem:[%s0 + $0x8] sm:$0xff]
  %v16 = vld [vmem:[%s0 + $0x10] sm:$0xff]
  %v17 = vld [vmem:[%s0 + $0x18] sm:$0xff]
  %v18 = vld [vmem:[%s0 + $0x20] sm:$0xff]
  %v19 = vld [vmem:[%s0 + $0x28] sm:$0xff]
  %v20 = vld [vmem:[%s0 + $0x30] sm:$0xff]
  %v21 = vld [vmem:[%s0 + $0x38] sm:$0xff]
  %vm22 = vcmask 261120
  %v23 = vsel %vm22, %v14, 0.0
  %v24 = vsel %vm22, %v15, 0.0
  %v25 = vadd.f32 %v23, %v24
  %v26 = vsel %vm22, %v16, 0.0
  %v27 = vadd.f32 %v25, %v26
  %v28 = vsel %vm22, %v17, 0.0
  %v29 = vadd.f32 %v27, %v28
  %v30 = vsel %vm22, %v18, 0.0
  %v31 = vadd.f32 %v29, %v30
  %v32 = vsel %vm22, %v19, 0.0
  %v33 = vadd.f32 %v31, %v32
  %v34 = vsel %vm22, %v20, 0.0
  %v35 = vadd.f32 %v33, %v34
  %v36 = vsel %vm22, %v21, 0.0
  %v37 = vadd.f32 %v35, %v36
  %v38 = vrot.slane %v37, 4
  %v39 = vadd.f32 %v37, %v38
  %v40 = vrot.slane %v39, 2
  %v41 = vadd.f32 %v39, %v40
  %v42 = vrot.slane %v41, 1
  %v43 = vadd.f32 %v41, %v42
  %v44 = vmul.f32 %v43, 0.015625
  %v45 = vsub.f32 %v14, %v44
  %v46 = vsub.f32 %v15, %v44
  %v47 = vsub.f32 %v16, %v44
  %v48 = vsub.f32 %v17, %v44
  %v49 = vsub.f32 %v18, %v44
  %v50 = vsub.f32 %v19, %v44
  %v51 = vsub.f32 %v20, %v44
  %v52 = vsub.f32 %v21, %v44
  %v53 = vmul.f32 %v45, %v45
  %v54 = vmul.f32 %v46, %v46
  %v55 = vmul.f32 %v47, %v47
  %v56 = vmul.f32 %v48, %v48
  %v57 = vmul.f32 %v49, %v49
  %v58 = vmul.f32 %v50, %v50
  %v59 = vmul.f32 %v51, %v51
  %v60 = vmul.f32 %v52, %v52
  %v61 = vsel %vm22, %v53, 0.0
  %v62 = vsel %vm22, %v54, 0.0
  %v63 = vadd.f32 %v61, %v62
  %v64 = vsel %vm22, %v55, 0.0
  %v65 = vadd.f32 %v63, %v64
  %v66 = vsel %vm22, %v56, 0.0
  %v67 = vadd.f32 %v65, %v66
  %v68 = vsel %vm22, %v57, 0.0
  %v69 = vadd.f32 %v67, %v68
  %v70 = vsel %vm22, %v58, 0.0
  %v71 = vadd.f32 %v69, %v70
  %v72 = vsel %vm22, %v59, 0.0
  %v73 = vadd.f32 %v71, %v72
  %v74 = vsel %vm22, %v60, 0.0
  %v75 = vadd.f32 %v73, %v74
  %v76 = vrot.slane %v75, 4
  %v77 = vadd.f32 %v75, %v76
  %v78 = vrot.slane %v77, 2
  %v79 = vadd.f32 %v77, %v78
  %v80 = vrot.slane %v79, 1
  %v81 = vadd.f32 %v79, %v80
  %v82 = vmul.f32 %v81, 0.015625
  %v83 = vadd.f32 %v82, 1e-05
  %v84 = vrsqrt.pop %v83
  %v85 = vld [vmem:[%s1] sm:$0x1]
  %v86 = vld [vmem:[%s2] sm:$0x1]
  %v87 = vmul.f32 %v84, %v85
  %v88 = vlaneseq
  %v89 = vshrl.u32 %v88, 7
  %v90 = vsub.s32 0, %v89
  %v91 = vrot.slane %v87, %v90
  %v92 = vmul.f32 %v45, %v91
  %v93 = vmul.f32 %v46, %v91
  %v94 = vmul.f32 %v47, %v91
  %v95 = vmul.f32 %v48, %v91
  %v96 = vmul.f32 %v49, %v91
  %v97 = vmul.f32 %v50, %v91
  %v98 = vmul.f32 %v51, %v91
  %v99 = vmul.f32 %v52, %v91
  %v101 = vlaneseq
  %v102 = vshrl.u32 %v101, 7
  %v103 = vsub.s32 0, %v102
  %v104 = vrot.slane %v86, %v103
  %v106 = vadd.f32 %v92, %v104
  %v107 = vadd.f32 %v93, %v104
  %v108 = vadd.f32 %v94, %v104
  %v109 = vadd.f32 %v95, %v104
  %v110 = vadd.f32 %v96, %v104
  %v111 = vadd.f32 %v97, %v104
  %v112 = vadd.f32 %v98, %v104
  %v113 = vadd.f32 %v99, %v104
  %114 = vst.msk [vmem:[%s3] sm:$0xff] %vm22, %v106
  %115 = vst.msk [vmem:[%s3 + $0x8] sm:$0xff] %vm22, %v107
  %116 = vst.msk [vmem:[%s3 + $0x10] sm:$0xff] %vm22, %v108
  %117 = vst.msk [vmem:[%s3 + $0x18] sm:$0xff] %vm22, %v109
  %118 = vst.msk [vmem:[%s3 + $0x20] sm:$0xff] %vm22, %v110
  %119 = vst.msk [vmem:[%s3 + $0x28] sm:$0xff] %vm22, %v111
  %120 = vst.msk [vmem:[%s3 + $0x30] sm:$0xff] %vm22, %v112
  %121 = vst.msk [vmem:[%s3 + $0x38] sm:$0xff] %vm22, %v113
  // Predicated region
  $region14: #{tpu_custom_call.1} parent=0 // pred_check
    _
  $region15: #{tpu_custom_call.1} parent=0 // pred_check_branch
    %123 = sbr.rel (0) target = $region17
  $region16: #{tpu_custom_call.1} parent=0 // pred_region
    _
  $region17: #{tpu_custom_call.1} parent=0 // pred_fallthru
    _
  // Predicated region
  $region18: #{tpu_custom_call.1} parent=0 // pred_check
    _
  $region19: #{tpu_custom_call.1} parent=0 // pred_check_branch
    %125 = sbr.rel (0) target = $region21
  $region20: #{tpu_custom_call.1} parent=0 // pred_region
    _
  $region21: #{tpu_custom_call.1} parent=0 // pred_fallthru
    _

</llo_original>
